<compile_context>
chip_gen: v7x
topology: tpu7x:2x2x1
jax: 0.10.0
libtpu: 0.0.40
codegen_flags: <defaults>
</compile_context>

<pallas_src>
import functools
import math

import jax
import jax.numpy as jnp
from jax.experimental import pallas as pl
from jax.experimental.pallas import tpu as pltpu


# ----------------------------------------------------------------------------
# Fused Pallas kernel: conv1 + bias + Swish + emb  ->  conv2 + bias + Swish
# ----------------------------------------------------------------------------
def _bottleneck_kernel(x_ref, w1_ref, b1_ref, w2_ref, b2_ref, emb_ref, o_ref,
                       *, H, W):
    # x_ref:   (1, Cin, H*W)  bf16   one batch element, channels on sublanes,
    #                                flattened H*W lane-dense on the 128-lane axis
    # w1_ref:  (C2, 9*Cin)    bf16   conv1 weights, K = (dy, dx, ci) folded
    # b1_ref:  (C2, 1)        f32
    # w2_ref:  (Cin, 9*C2)    bf16   conv2 weights
    # b2_ref:  (Cin, 1)       f32
    # emb_ref: (1, C2, 1)     f32    time_emb + cond_emb for this batch element
    # o_ref:   (1, Cin, H*W)  f32
    HW = H * W
    pad = W + 1                       # enough zero lanes to absorb every dy/dx shift

    # Edge masks (shared by both convs): a tap at dx-1 == -1 / +1 is invalid in
    # the first / last image column.  Out-of-range rows (dy) land in the zero
    # padding of the extended buffer, so no h-mask is needed.
    w_idx = jax.lax.broadcasted_iota(jnp.int32, (1, HW), 1) % W
    not_left = (w_idx > 0).astype(jnp.bfloat16)
    not_right = (w_idx < W - 1).astype(jnp.bfloat16)

    def im2col(z):
        # z: (C, H*W) bf16  ->  patch matrix (9*C, H*W) bf16,
        # rows ordered (dy, dx, ci) to match the pre-reshaped weights.
        c = z.shape[0]
        zeros = jnp.zeros((c, pad), jnp.bfloat16)
        zbuf = jnp.concatenate([zeros, z, zeros], axis=1)     # (C, H*W + 2*(W+1))
        taps = []
        for dy in range(3):
            for dx in range(3):
                start = pad + (dy - 1) * W + (dx - 1)         # static int >= 0
                tap = zbuf[:, start:start + HW]               # lane-shifted view
                if dx == 0:
                    tap = tap * not_left
                elif dx == 2:
                    tap = tap * not_right
                taps.append(tap)
        return jnp.concatenate(taps, axis=0)

    x = x_ref[0]                                              # (Cin, H*W) bf16

    # ---- conv1 (+bias) -> Swish -> + (time_emb + cond_emb) -------------------
    a1 = jnp.dot(w1_ref[...], im2col(x),
                 preferred_element_type=jnp.float32)          # (C2, H*W) f32, MXU
    a1 = a1 + b1_ref[...]                                     # per-channel bias
    h = a1 * jax.nn.sigmoid(a1)                               # Swish (f32)
    h = h + emb_ref[0]                                        # per-batch channel add

    # ---- conv2 (+bias) -> Swish ----------------------------------------------
    a2 = jnp.dot(w2_ref[...], im2col(h.astype(jnp.bfloat16)),
                 preferred_element_type=jnp.float32)          # (Cin, H*W) f32
    a2 = a2 + b2_ref[...]
    y = a2 * jax.nn.sigmoid(a2)
    o_ref[0] = y.astype(o_ref.dtype)                          # lane-dense store


# ----------------------------------------------------------------------------
# Tiny embedding MLPs (B x 2C) — kept as plain JAX glue (too small for a kernel).
# ----------------------------------------------------------------------------
def swish(x):
    return x * jax.nn.sigmoid(x)


def time_embedding(t, p):
    # TimeEmbedding(n_channels = 2C)
    n_channels = p["lin2_w"].shape[1]
    half_dim = n_channels // 8
    scale = math.log(10000) / (half_dim - 1)
    freqs = jnp.exp(jnp.arange(half_dim, dtype=jnp.float32) * -scale)
    emb = t[:, None] * freqs[None, :]
    emb = jnp.concatenate([jnp.sin(emb), jnp.cos(emb)], axis=1)   # (B, 2C//4)
    emb = swish(emb @ p["lin1_w"] + p["lin1_b"])
    emb = emb @ p["lin2_w"] + p["lin2_b"]
    return emb


def cond_embedding(c, p):
    # ConditionEmbedding(2C, n_conditions)
    emb = p["table"][c]
    emb = swish(emb @ p["lin1_w"] + p["lin1_b"])
    emb = emb @ p["lin2_w"] + p["lin2_b"]
    return emb


# ----------------------------------------------------------------------------
# Bottleneck forward (NCHW in / NCHW out, matching the PyTorch module)
# ----------------------------------------------------------------------------
def bottleneck_forward(x_nchw, t, c, params):
    B, C, H, W = x_nchw.shape
    C2 = 2 * C
    HW = H * W

    emb = time_embedding(t, params["time"]) + cond_embedding(c, params["cond"])

    # Kernel-side layouts (all lane-dense; bf16 for matmul operands only).
    x2 = x_nchw.reshape(B, C, HW).astype(jnp.bfloat16)
    w1 = jnp.transpose(params["conv1_w"], (3, 0, 1, 2)).reshape(C2, 9 * C)
    w2 = jnp.transpose(params["conv2_w"], (3, 0, 1, 2)).reshape(C, 9 * C2)
    w1 = w1.astype(jnp.bfloat16)
    w2 = w2.astype(jnp.bfloat16)
    b1 = params["conv1_b"].reshape(C2, 1).astype(jnp.float32)
    b2 = params["conv2_b"].reshape(C, 1).astype(jnp.float32)
    emb3 = emb.reshape(B, C2, 1).astype(jnp.float32)

    kernel = functools.partial(_bottleneck_kernel, H=H, W=W)
    out = pl.pallas_call(
        kernel,
        out_shape=jax.ShapeDtypeStruct((B, C, HW), jnp.float32),
        grid_spec=pltpu.PrefetchScalarGridSpec(
            num_scalar_prefetch=0,
            grid=(B,),
            in_specs=[
                pl.BlockSpec((1, C, HW), lambda b: (b, 0, 0)),      # x (per batch)
                pl.BlockSpec((C2, 9 * C), lambda b: (0, 0)),        # w1 (resident)
                pl.BlockSpec((C2, 1), lambda b: (0, 0)),            # b1 (resident)
                pl.BlockSpec((C, 9 * C2), lambda b: (0, 0)),        # w2 (resident)
                pl.BlockSpec((C, 1), lambda b: (0, 0)),             # b2 (resident)
                pl.BlockSpec((1, C2, 1), lambda b: (b, 0, 0)),      # emb (per batch)
            ],
            out_specs=pl.BlockSpec((1, C, HW), lambda b: (b, 0, 0)),
        ),
        compiler_params=pltpu.CompilerParams(
            dimension_semantics=("parallel",),   # batch across v7x's two TCs
        ),
    )(x2, w1, b1, w2, b2, emb3)
    return out.reshape(B, C, H, W)


# ----------------------------------------------------------------------------
# Deterministic synthetic parameter init (shapes from Bottleneck.__init__)
# ----------------------------------------------------------------------------
def init_params(key, C, n_conditions):
    C2 = 2 * C
    ks = jax.random.split(key, 12)

    def w(k, shape, scale=0.1):
        return jax.random.normal(k, shape, jnp.float32) * scale

    return {
        "conv1_w": w(ks[0], (3, 3, C, C2)),       # HWIO
        "conv1_b": w(ks[1], (C2,)),
        "conv2_w": w(ks[2], (3, 3, C2, C)),
        "conv2_b": w(ks[3], (C,)),
        "time": {
            "lin1_w": w(ks[4], (C2 // 4, C2)),
            "lin1_b": w(ks[5], (C2,)),
            "lin2_w": w(ks[6], (C2, C2)),
            "lin2_b": w(ks[7], (C2,)),
        },
        "cond": {
            "table": w(ks[8], (n_conditions, C2)),
            "lin1_w": w(ks[9], (C2, C2)),
            "lin1_b": w(ks[10], (C2,)),
            "lin2_w": w(ks[11], (C2, C2)),
            "lin2_b": jnp.zeros((C2,), jnp.float32),
        },
    }


# ----------------------------------------------------------------------------
# Pure-JAX reference (XLA conv) for correctness checks
# ----------------------------------------------------------------------------
def ref_forward(x, t, c, params, matmul_dtype=jnp.float32):
    def conv(z, w, b):
        out = jax.lax.conv_general_dilated(
            z.astype(matmul_dtype), w.astype(matmul_dtype), (1, 1),
            ((1, 1), (1, 1)),
            dimension_numbers=("NCHW", "HWIO", "NCHW"),
            preferred_element_type=jnp.float32)
        return out + b[None, :, None, None]

    emb = time_embedding(t, params["time"]) + cond_embedding(c, params["cond"])
    h = swish(conv(x, params["conv1_w"], params["conv1_b"]))
    h = h + emb[:, :, None, None]
    return swish(conv(h, params["conv2_w"], params["conv2_b"]))


if __name__ == "__main__":
    key = jax.random.PRNGKey(0)
    k_x, k_t, k_c, k_p = jax.random.split(key, 4)

    # input_channels must be >= 8 so TimeEmbedding's half_dim - 1 > 0
    B, C, H, W = 2, 8, 16, 16
    n_conditions = 10

    x = jax.random.normal(k_x, (B, C, H, W), jnp.float32)
    t = jax.random.uniform(k_t, (B,), jnp.float32, 0.0, 1000.0)
    c = jax.random.randint(k_c, (B,), 0, n_conditions)
    params = init_params(k_p, C, n_conditions)

    out = jax.jit(bottleneck_forward)(x, t, c, params)
    out = jax.block_until_ready(out)
    assert out.shape == (B, C, H, W)

    # Primary check: against an XLA reference with matching (bf16-operand,
    # f32-accumulate) precision — differences are accumulation order only.
    ref_match = ref_forward(x, t, c, params, matmul_dtype=jnp.bfloat16)
    assert jnp.allclose(out, ref_match, atol=2e-3, rtol=2e-2), \
        float(jnp.max(jnp.abs(out - ref_match)))

    # Secondary sanity check vs the full-f32 reference (loose: bf16 operand
    # rounding of x / weights / h propagates through two 3x3 convolutions).
    ref_f32 = ref_forward(x, t, c, params)
    assert jnp.allclose(out, ref_f32, atol=0.15, rtol=0.15), \
        float(jnp.max(jnp.abs(out - ref_f32)))

    print("KERNEL_OK")
</pallas_src>

<mosaic_0001>
module attributes {stable_mosaic.version = 11 : i64} {
  func.func @_bottleneck_kernel(%arg0: i32, %arg1: memref<1x8x256xbf16, #tpu.memory_space<vmem>>, %arg2: memref<16x72xbf16, #tpu.memory_space<vmem>>, %arg3: memref<16x1xf32, #tpu.memory_space<vmem>>, %arg4: memref<8x144xbf16, #tpu.memory_space<vmem>>, %arg5: memref<8x1xf32, #tpu.memory_space<vmem>>, %arg6: memref<1x16x1xf32, #tpu.memory_space<vmem>>, %arg7: memref<1x8x256xf32, #tpu.memory_space<vmem>>) attributes {dimension_semantics = [#tpu.dimension_semantics<parallel>], iteration_bounds = array<i64: 2>, scalar_prefetch = 0 : i64, scratch_operands = 0 : i64, tpu.core_type = #tpu.core_type<tc>, window_params = [{transform_indices = @transform_0, window_bounds = array<i64: 1, 8, 256>}, {pipeline_mode = #tpu.pipeline_mode<synchronous>, transform_indices = @transform_1, window_bounds = array<i64: 16, 72>}, {pipeline_mode = #tpu.pipeline_mode<synchronous>, transform_indices = @transform_2, window_bounds = array<i64: 16, 1>}, {pipeline_mode = #tpu.pipeline_mode<synchronous>, transform_indices = @transform_3, window_bounds = array<i64: 8, 144>}, {pipeline_mode = #tpu.pipeline_mode<synchronous>, transform_indices = @transform_4, window_bounds = array<i64: 8, 1>}, {transform_indices = @transform_5, window_bounds = array<i64: 1, 16, 1>}, {transform_indices = @transform_6, window_bounds = array<i64: 1, 8, 256>}]} {
    %0 = tpu.iota {dimensions = array<i32: 1>} : vector<1x256xi32>
    %c16_i32 = arith.constant 16 : i32
    %c0_i32 = arith.constant 0 : i32
    %1 = arith.cmpi eq, %c16_i32, %c0_i32 : i32
    %c1_i32 = arith.constant 1 : i32
    %2 = arith.select %1, %c1_i32, %c16_i32 : i32
    %3 = vector.broadcast %2 : i32 to vector<1x256xi32>
    %4 = arith.remsi %0, %3 : vector<1x256xi32>
    %c0_i32_0 = arith.constant 0 : i32
    %5 = vector.broadcast %c0_i32_0 : i32 to vector<1x256xi32>
    %6 = arith.cmpi ne, %4, %5 : vector<1x256xi32>
    %c0_i32_1 = arith.constant 0 : i32
    %7 = vector.broadcast %c0_i32_1 : i32 to vector<1x256xi32>
    %8 = arith.cmpi slt, %4, %7 : vector<1x256xi32>
    %c0_i32_2 = arith.constant 0 : i32
    %9 = arith.cmpi slt, %2, %c0_i32_2 : i32
    %10 = vector.broadcast %9 : i1 to vector<1x256xi1>
    %11 = vector.broadcast %10 : vector<1x256xi1> to vector<1x256xi1>
    %12 = arith.xori %8, %11 : vector<1x256xi1>
    %13 = arith.andi %12, %6 : vector<1x256xi1>
    %14 = vector.broadcast %2 : i32 to vector<1x256xi32>
    %15 = arith.addi %4, %14 : vector<1x256xi32>
    %16 = arith.select %13, %15, %4 : vector<1x256xi1>, vector<1x256xi32>
    %c0_i32_3 = arith.constant 0 : i32
    %17 = vector.broadcast %c0_i32_3 : i32 to vector<1x256xi32>
    %18 = arith.cmpi sgt, %16, %17 : vector<1x256xi32>
    %19 = arith.extui %18 : vector<1x256xi1> to vector<1x256xi32>
    %20 = arith.sitofp %19 : vector<1x256xi32> to vector<1x256xf32>
    %21 = arith.truncf %20 : vector<1x256xf32> to vector<1x256xbf16>
    %c15_i32 = arith.constant 15 : i32
    %22 = vector.broadcast %c15_i32 : i32 to vector<1x256xi32>
    %23 = arith.cmpi slt, %16, %22 : vector<1x256xi32>
    %24 = arith.extui %23 : vector<1x256xi1> to vector<1x256xi32>
    %25 = arith.sitofp %24 : vector<1x256xi32> to vector<1x256xf32>
    %26 = arith.truncf %25 : vector<1x256xf32> to vector<1x256xbf16>
    %c0 = arith.constant 0 : index
    %c0_4 = arith.constant 0 : index
    %c0_5 = arith.constant 0 : index
    %27 = vector.load %arg1[%c0, %c0_4, %c0_5] : memref<1x8x256xbf16, #tpu.memory_space<vmem>>, vector<1x8x256xbf16>
    %28 = vector.shape_cast %27 : vector<1x8x256xbf16> to vector<8x256xbf16>
    %c0_6 = arith.constant 0 : index
    %c0_7 = arith.constant 0 : index
    %29 = vector.load %arg2[%c0_6, %c0_7] : memref<16x72xbf16, #tpu.memory_space<vmem>>, vector<16x72xbf16>
    %cst = arith.constant 0.000000e+00 : bf16
    %30 = vector.broadcast %cst : bf16 to vector<8x17xbf16>
    %31 = tpu.concatenate %30, %28, %30 in 1 : vector<8x17xbf16>, vector<8x256xbf16>, vector<8x17xbf16> -> vector<8x290xbf16>
    %32 = vector.extract_strided_slice %31 {offsets = [0, 0], sizes = [8, 256], strides = [1, 1]} : vector<8x290xbf16> to vector<8x256xbf16>
    %33 = vector.broadcast %21 : vector<1x256xbf16> to vector<8x256xbf16>
    %34 = arith.mulf %32, %33 : vector<8x256xbf16>
    %35 = vector.extract_strided_slice %31 {offsets = [0, 1], sizes = [8, 256], strides = [1, 1]} : vector<8x290xbf16> to vector<8x256xbf16>
    %36 = vector.extract_strided_slice %31 {offsets = [0, 2], sizes = [8, 256], strides = [1, 1]} : vector<8x290xbf16> to vector<8x256xbf16>
    %37 = vector.broadcast %26 : vector<1x256xbf16> to vector<8x256xbf16>
    %38 = arith.mulf %36, %37 : vector<8x256xbf16>
    %39 = vector.extract_strided_slice %31 {offsets = [0, 16], sizes = [8, 256], strides = [1, 1]} : vector<8x290xbf16> to vector<8x256xbf16>
    %40 = vector.broadcast %21 : vector<1x256xbf16> to vector<8x256xbf16>
    %41 = arith.mulf %39, %40 : vector<8x256xbf16>
    %42 = vector.extract_strided_slice %31 {offsets = [0, 17], sizes = [8, 256], strides = [1, 1]} : vector<8x290xbf16> to vector<8x256xbf16>
    %43 = vector.extract_strided_slice %31 {offsets = [0, 18], sizes = [8, 256], strides = [1, 1]} : vector<8x290xbf16> to vector<8x256xbf16>
    %44 = vector.broadcast %26 : vector<1x256xbf16> to vector<8x256xbf16>
    %45 = arith.mulf %43, %44 : vector<8x256xbf16>
    %46 = vector.extract_strided_slice %31 {offsets = [0, 32], sizes = [8, 256], strides = [1, 1]} : vector<8x290xbf16> to vector<8x256xbf16>
    %47 = vector.broadcast %21 : vector<1x256xbf16> to vector<8x256xbf16>
    %48 = arith.mulf %46, %47 : vector<8x256xbf16>
    %49 = vector.extract_strided_slice %31 {offsets = [0, 33], sizes = [8, 256], strides = [1, 1]} : vector<8x290xbf16> to vector<8x256xbf16>
    %50 = vector.extract_strided_slice %31 {offsets = [0, 34], sizes = [8, 256], strides = [1, 1]} : vector<8x290xbf16> to vector<8x256xbf16>
    %51 = vector.broadcast %26 : vector<1x256xbf16> to vector<8x256xbf16>
    %52 = arith.mulf %50, %51 : vector<8x256xbf16>
    %53 = tpu.concatenate %34, %35, %38, %41, %42, %45, %48, %49, %52 in 0 : vector<8x256xbf16>, vector<8x256xbf16>, vector<8x256xbf16>, vector<8x256xbf16>, vector<8x256xbf16>, vector<8x256xbf16>, vector<8x256xbf16>, vector<8x256xbf16>, vector<8x256xbf16> -> vector<72x256xbf16>
    %cst_8 = arith.constant dense<0.000000e+00> : vector<16x256xf32>
    %54 = tpu.matmul %29, %53, %cst_8 {dimension_numbers = #tpu.dot_dimension_numbers<[1], [0], [0], [1], [0, 0, 1, 1], [], []>} : vector<16x72xbf16>, vector<72x256xbf16>, vector<16x256xf32> -> vector<16x256xf32>
    %c0_9 = arith.constant 0 : index
    %c0_10 = arith.constant 0 : index
    %55 = vector.load %arg3[%c0_9, %c0_10] : memref<16x1xf32, #tpu.memory_space<vmem>>, vector<16x1xf32>
    %56 = vector.broadcast %55 : vector<16x1xf32> to vector<16x256xf32>
    %57 = arith.addf %54, %56 : vector<16x256xf32>
    %58 = arith.negf %57 : vector<16x256xf32>
    %59 = math.exp %58 : vector<16x256xf32>
    %cst_11 = arith.constant 1.000000e+00 : f32
    %60 = vector.broadcast %cst_11 : f32 to vector<16x256xf32>
    %61 = arith.addf %60, %59 : vector<16x256xf32>
    %62 = arith.divf %60, %61 : vector<16x256xf32>
    %63 = arith.mulf %57, %62 : vector<16x256xf32>
    %c0_12 = arith.constant 0 : index
    %c0_13 = arith.constant 0 : index
    %c0_14 = arith.constant 0 : index
    %64 = vector.load %arg6[%c0_12, %c0_13, %c0_14] : memref<1x16x1xf32, #tpu.memory_space<vmem>>, vector<1x16x1xf32>
    %65 = vector.shape_cast %64 : vector<1x16x1xf32> to vector<16x1xf32>
    %66 = vector.broadcast %65 : vector<16x1xf32> to vector<16x256xf32>
    %67 = arith.addf %63, %66 : vector<16x256xf32>
    %c0_15 = arith.constant 0 : index
    %c0_16 = arith.constant 0 : index
    %68 = vector.load %arg4[%c0_15, %c0_16] : memref<8x144xbf16, #tpu.memory_space<vmem>>, vector<8x144xbf16>
    %69 = arith.truncf %67 : vector<16x256xf32> to vector<16x256xbf16>
    %cst_17 = arith.constant 0.000000e+00 : bf16
    %70 = vector.broadcast %cst_17 : bf16 to vector<16x17xbf16>
    %71 = tpu.concatenate %70, %69, %70 in 1 : vector<16x17xbf16>, vector<16x256xbf16>, vector<16x17xbf16> -> vector<16x290xbf16>
    %72 = vector.extract_strided_slice %71 {offsets = [0, 0], sizes = [16, 256], strides = [1, 1]} : vector<16x290xbf16> to vector<16x256xbf16>
    %73 = vector.broadcast %21 : vector<1x256xbf16> to vector<16x256xbf16>
    %74 = arith.mulf %72, %73 : vector<16x256xbf16>
    %75 = vector.extract_strided_slice %71 {offsets = [0, 1], sizes = [16, 256], strides = [1, 1]} : vector<16x290xbf16> to vector<16x256xbf16>
    %76 = vector.extract_strided_slice %71 {offsets = [0, 2], sizes = [16, 256], strides = [1, 1]} : vector<16x290xbf16> to vector<16x256xbf16>
    %77 = vector.broadcast %26 : vector<1x256xbf16> to vector<16x256xbf16>
    %78 = arith.mulf %76, %77 : vector<16x256xbf16>
    %79 = vector.extract_strided_slice %71 {offsets = [0, 16], sizes = [16, 256], strides = [1, 1]} : vector<16x290xbf16> to vector<16x256xbf16>
    %80 = vector.broadcast %21 : vector<1x256xbf16> to vector<16x256xbf16>
    %81 = arith.mulf %79, %80 : vector<16x256xbf16>
    %82 = vector.extract_strided_slice %71 {offsets = [0, 17], sizes = [16, 256], strides = [1, 1]} : vector<16x290xbf16> to vector<16x256xbf16>
    %83 = vector.extract_strided_slice %71 {offsets = [0, 18], sizes = [16, 256], strides = [1, 1]} : vector<16x290xbf16> to vector<16x256xbf16>
    %84 = vector.broadcast %26 : vector<1x256xbf16> to vector<16x256xbf16>
    %85 = arith.mulf %83, %84 : vector<16x256xbf16>
    %86 = vector.extract_strided_slice %71 {offsets = [0, 32], sizes = [16, 256], strides = [1, 1]} : vector<16x290xbf16> to vector<16x256xbf16>
    %87 = vector.broadcast %21 : vector<1x256xbf16> to vector<16x256xbf16>
    %88 = arith.mulf %86, %87 : vector<16x256xbf16>
    %89 = vector.extract_strided_slice %71 {offsets = [0, 33], sizes = [16, 256], strides = [1, 1]} : vector<16x290xbf16> to vector<16x256xbf16>
    %90 = vector.extract_strided_slice %71 {offsets = [0, 34], sizes = [16, 256], strides = [1, 1]} : vector<16x290xbf16> to vector<16x256xbf16>
    %91 = vector.broadcast %26 : vector<1x256xbf16> to vector<16x256xbf16>
    %92 = arith.mulf %90, %91 : vector<16x256xbf16>
    %93 = tpu.concatenate %74, %75, %78, %81, %82, %85, %88, %89, %92 in 0 : vector<16x256xbf16>, vector<16x256xbf16>, vector<16x256xbf16>, vector<16x256xbf16>, vector<16x256xbf16>, vector<16x256xbf16>, vector<16x256xbf16>, vector<16x256xbf16>, vector<16x256xbf16> -> vector<144x256xbf16>
    %cst_18 = arith.constant dense<0.000000e+00> : vector<8x256xf32>
    %94 = tpu.matmul %68, %93, %cst_18 {dimension_numbers = #tpu.dot_dimension_numbers<[1], [0], [0], [1], [0, 0, 1, 1], [], []>} : vector<8x144xbf16>, vector<144x256xbf16>, vector<8x256xf32> -> vector<8x256xf32>
    %c0_19 = arith.constant 0 : index
    %c0_20 = arith.constant 0 : index
    %95 = vector.load %arg5[%c0_19, %c0_20] : memref<8x1xf32, #tpu.memory_space<vmem>>, vector<8x1xf32>
    %96 = vector.broadcast %95 : vector<8x1xf32> to vector<8x256xf32>
    %97 = arith.addf %94, %96 : vector<8x256xf32>
    %98 = arith.negf %97 : vector<8x256xf32>
    %99 = math.exp %98 : vector<8x256xf32>
    %cst_21 = arith.constant 1.000000e+00 : f32
    %100 = vector.broadcast %cst_21 : f32 to vector<8x256xf32>
    %101 = arith.addf %100, %99 : vector<8x256xf32>
    %102 = arith.divf %100, %101 : vector<8x256xf32>
    %103 = arith.mulf %97, %102 : vector<8x256xf32>
    %c0_22 = arith.constant 0 : index
    %c0_23 = arith.constant 0 : index
    %c0_24 = arith.constant 0 : index
    %104 = vector.load %arg7[%c0_22, %c0_23, %c0_24] : memref<1x8x256xf32, #tpu.memory_space<vmem>>, vector<1x8x256xf32>
    %105 = vector.shape_cast %104 : vector<1x8x256xf32> to vector<8x256xf32>
    %106 = vector.shape_cast %103 : vector<8x256xf32> to vector<1x8x256xf32>
    tpu.vector_store %arg7[%c0_22, %c0_23, %c0_24], %106 {strides = array<i32>} : memref<1x8x256xf32, #tpu.memory_space<vmem>>, vector<1x8x256xf32>,
    return
  }
  func.func @transform_0(%arg0: i32) -> (i32, i32, i32) {
    %c0_i32 = arith.constant 0 : i32
    %c0_i32_0 = arith.constant 0 : i32
    %c0_i32_1 = arith.constant 0 : i32
    return %arg0, %c0_i32, %c0_i32_0 : i32, i32, i32
  }
  func.func @transform_1(%arg0: i32) -> (i32, i32) {
    %c0_i32 = arith.constant 0 : i32
    %c0_i32_0 = arith.constant 0 : i32
    %c0_i32_1 = arith.constant 0 : i32
    return %c0_i32, %c0_i32_0 : i32, i32
  }
  func.func @transform_2(%arg0: i32) -> (i32, i32) {
    %c0_i32 = arith.constant 0 : i32
    %c0_i32_0 = arith.constant 0 : i32
    %c0_i32_1 = arith.constant 0 : i32
    return %c0_i32, %c0_i32_0 : i32, i32
  }
  func.func @transform_3(%arg0: i32) -> (i32, i32) {
    %c0_i32 = arith.constant 0 : i32
    %c0_i32_0 = arith.constant 0 : i32
    %c0_i32_1 = arith.constant 0 : i32
    return %c0_i32, %c0_i32_0 : i32, i32
  }
  func.func @transform_4(%arg0: i32) -> (i32, i32) {
    %c0_i32 = arith.constant 0 : i32
    %c0_i32_0 = arith.constant 0 : i32
    %c0_i32_1 = arith.constant 0 : i32
    return %c0_i32, %c0_i32_0 : i32, i32
  }
  func.func @transform_5(%arg0: i32) -> (i32, i32, i32) {
    %c0_i32 = arith.constant 0 : i32
    %c0_i32_0 = arith.constant 0 : i32
    %c0_i32_1 = arith.constant 0 : i32
    return %arg0, %c0_i32, %c0_i32_0 : i32, i32, i32
  }
  func.func @transform_6(%arg0: i32) -> (i32, i32, i32) {
    %c0_i32 = arith.constant 0 : i32
    %c0_i32_0 = arith.constant 0 : i32
    %c0_i32_1 = arith.constant 0 : i32
    return %arg0, %c0_i32, %c0_i32_0 : i32, i32, i32
  }
}

</mosaic_0001>

<llo_original>
// kernel: bottleneck_forward.1
$region0: #{bottleneck_forward.1}
  #allocation0 [shape = 'u32[]', space=smem, size = 0x4, offset = 0x4, fixed_abs, tag = 'smem constant byte address 0x4 - core index']
  #allocation1 [shape = 'u32[144,128]{1,0:T(1,128)}', space=vmem, size = 0x12000, scoped, tag = 'internal scratch']
  %s0 = inlined_call_operand.vmem [shape: bf16[2,8,256], index: 0, kind: input, shape index: {}]
  %s1 = inlined_call_operand.vmem [shape: bf16[16,72], index: 1, kind: input, shape index: {}]
  %s2 = inlined_call_operand.vmem [shape: f32[16,1], index: 2, kind: input, shape index: {}]
  %s3 = inlined_call_operand.vmem [shape: bf16[8,144], index: 3, kind: input, shape index: {}]
  %s4 = inlined_call_operand.vmem [shape: f32[8,1], index: 4, kind: input, shape index: {}]
  %s5 = inlined_call_operand.vmem [shape: f32[2,16,1], index: 5, kind: input, shape index: {}]
  %s6 = inlined_call_operand.vmem [shape: f32[2,8,256], index: 6, kind: output, shape index: {}]
  %s7 = sld [smem:[#allocation0]]
  $region57: #{bottleneck_forward.1} parent=0
    _
  %s9 = ssub.s32 1, %s7
  %s10 = scalar_select 0, %s9, %s7
  loop: start=0, step=1, limit=4
  $region2: #{bottleneck_forward.1} parent=0 // loop_pre_header
    _
  $region3: #{bottleneck_forward.1} parent=0 // loop_header
    %s12 = sphi 0, %s16
    %p13 = scmp.ge.s32.totalorder %s12, 4
    %s22 = sphi 0, %s24
    %s25 = sphi 0, %s22
    %s26 = sphi 0, %s25
    %s42 = sphi 0, %s26
    %s46 = sphi 0, %s46
    %s48 = sphi 0, %s46
    %s49 = sphi 0, %s48
    %s63 = sphi 0, %s49
    %s67 = sphi 0, %s67
    %s69 = sphi 0, %s67
    %s70 = sphi 0, %s69
    %s84 = sphi 0, %s70
    %s88 = sphi 0, %s88
    %s90 = sphi 0, %s88
    %s91 = sphi 0, %s90
    %s105 = sphi 0, %s91
    %s109 = sphi 0, %s109
    %s111 = sphi 0, %s109
    %s112 = sphi 0, %s111
    %s126 = sphi 0, %s112
    %s132 = sphi 0, %s134
    %s135 = sphi 0, %s132
    %s136 = sphi 0, %s135
    %s152 = sphi 0, %s136
    %s158 = sphi 0, %s160
    %s161 = sphi 0, %s158
    %s162 = sphi 0, %s161
    %s178 = sphi 0, %s162
  $region4: #{bottleneck_forward.1} parent=0 // loop_header_branch
    %15 = sbr.rel (%p13) target = $region8
  $region5: #{bottleneck_forward.1} parent=0 // loop_body
    %s17 = ssub.s32 %s12, 1
    %s18 = ssub.s32 %s12, 2
    %s19 = sadd.s32 %s12, 1
    %s20 = ssub.s32 %s12, %s19
    %p21 = scmp.eq.s32.totalorder %s20, 0
    %s23 = sadd.s32 %s22, 1
    %s24 = scalar_select %p21, %s22, %s23
    %p27 = pneg %p21
    %p28 = scmp.eq.s32.totalorder %s12, 1
    %p29 = por %p27, %p28
    %p30 = scmp.ne.s32.totalorder %s22, %s25
    %p31 = scmp.eq.s32.totalorder %s12, 0
    %p32 = por %p30, %p31
    %p33 = scmp.ne.s32.totalorder %s22, %s25
    %p34 = scmp.eq.s32.totalorder %s17, 1
    %p35 = por %p33, %p34
    %p36 = scmp.ne.s32.totalorder %s25, %s26
    %p37 = scmp.eq.s32.totalorder %s17, 0
    %p38 = por %p36, %p37
    %p39 = scmp.ne.s32.totalorder %s25, %s26
    %p40 = scmp.eq.s32.totalorder %s18, 1
    %p41 = por %p39, %p40
    %p43 = scmp.ne.s32.totalorder %s26, %s42
    %p44 = scmp.eq.s32.totalorder %s18, 0
    %p45 = por %p43, %p44
    %s47 = sadd.s32 %s46, 1
    %p50 = scmp.eq.s32.totalorder %s12, 1
    %p51 = scmp.ne.s32.totalorder %s46, %s48
    %p52 = scmp.eq.s32.totalorder %s12, 0
    %p53 = por %p51, %p52
    %p54 = scmp.ne.s32.totalorder %s46, %s48
    %p55 = scmp.eq.s32.totalorder %s17, 1
    %p56 = por %p54, %p55
    %p57 = scmp.ne.s32.totalorder %s48, %s49
    %p58 = scmp.eq.s32.totalorder %s17, 0
    %p59 = por %p57, %p58
    %p60 = scmp.ne.s32.totalorder %s48, %s49
    %p61 = scmp.eq.s32.totalorder %s18, 1
    %p62 = por %p60, %p61
    %p64 = scmp.ne.s32.totalorder %s49, %s63
    %p65 = scmp.eq.s32.totalorder %s18, 0
    %p66 = por %p64, %p65
    %s68 = sadd.s32 %s67, 1
    %p71 = scmp.eq.s32.totalorder %s12, 1
    %p72 = scmp.ne.s32.totalorder %s67, %s69
    %p73 = scmp.eq.s32.totalorder %s12, 0
    %p74 = por %p72, %p73
    %p75 = scmp.ne.s32.totalorder %s67, %s69
    %p76 = scmp.eq.s32.totalorder %s17, 1
    %p77 = por %p75, %p76
    %p78 = scmp.ne.s32.totalorder %s69, %s70
    %p79 = scmp.eq.s32.totalorder %s17, 0
    %p80 = por %p78, %p79
    %p81 = scmp.ne.s32.totalorder %s69, %s70
    %p82 = scmp.eq.s32.totalorder %s18, 1
    %p83 = por %p81, %p82
    %p85 = scmp.ne.s32.totalorder %s70, %s84
    %p86 = scmp.eq.s32.totalorder %s18, 0
    %p87 = por %p85, %p86
    %s89 = sadd.s32 %s88, 1
    %p92 = scmp.eq.s32.totalorder %s12, 1
    %p93 = scmp.ne.s32.totalorder %s88, %s90
    %p94 = scmp.eq.s32.totalorder %s12, 0
    %p95 = por %p93, %p94
    %p96 = scmp.ne.s32.totalorder %s88, %s90
    %p97 = scmp.eq.s32.totalorder %s17, 1
    %p98 = por %p96, %p97
    %p99 = scmp.ne.s32.totalorder %s90, %s91
    %p100 = scmp.eq.s32.totalorder %s17, 0
    %p101 = por %p99, %p100
    %p102 = scmp.ne.s32.totalorder %s90, %s91
    %p103 = scmp.eq.s32.totalorder %s18, 1
    %p104 = por %p102, %p103
    %p106 = scmp.ne.s32.totalorder %s91, %s105
    %p107 = scmp.eq.s32.totalorder %s18, 0
    %p108 = por %p106, %p107
    %s110 = sadd.s32 %s109, 1
    %p113 = scmp.eq.s32.totalorder %s12, 1
    %p114 = scmp.ne.s32.totalorder %s109, %s111
    %p115 = scmp.eq.s32.totalorder %s12, 0
    %p116 = por %p114, %p115
    %p117 = scmp.ne.s32.totalorder %s109, %s111
    %p118 = scmp.eq.s32.totalorder %s17, 1
    %p119 = por %p117, %p118
    %p120 = scmp.ne.s32.totalorder %s111, %s112
    %p121 = scmp.eq.s32.totalorder %s17, 0
    %p122 = por %p120, %p121
    %p123 = scmp.ne.s32.totalorder %s111, %s112
    %p124 = scmp.eq.s32.totalorder %s18, 1
    %p125 = por %p123, %p124
    %p127 = scmp.ne.s32.totalorder %s112, %s126
    %p128 = scmp.eq.s32.totalorder %s18, 0
    %p129 = por %p127, %p128
    %s130 = ssub.s32 %s12, %s19
    %p131 = scmp.eq.s32.totalorder %s130, 0
    %s133 = sadd.s32 %s132, 1
    %s134 = scalar_select %p131, %s132, %s133
    %p137 = pneg %p131
    %p138 = scmp.eq.s32.totalorder %s12, 1
    %p139 = por %p137, %p138
    %p140 = scmp.ne.s32.totalorder %s132, %s135
    %p141 = scmp.eq.s32.totalorder %s12, 0
    %p142 = por %p140, %p141
    %p143 = scmp.ne.s32.totalorder %s132, %s135
    %p144 = scmp.eq.s32.totalorder %s17, 1
    %p145 = por %p143, %p144
    %p146 = scmp.ne.s32.totalorder %s135, %s136
    %p147 = scmp.eq.s32.totalorder %s17, 0
    %p148 = por %p146, %p147
    %p149 = scmp.ne.s32.totalorder %s135, %s136
    %p150 = scmp.eq.s32.totalorder %s18, 1
    %p151 = por %p149, %p150
    %p153 = scmp.ne.s32.totalorder %s136, %s152
    %p154 = scmp.eq.s32.totalorder %s18, 0
    %p155 = por %p153, %p154
    %s156 = ssub.s32 %s12, %s19
    %p157 = scmp.eq.s32.totalorder %s156, 0
    %s159 = sadd.s32 %s158, 1
    %s160 = scalar_select %p157, %s158, %s159
    %p163 = pneg %p157
    %p164 = scmp.eq.s32.totalorder %s12, 1
    %p165 = por %p163, %p164
    %p166 = scmp.ne.s32.totalorder %s158, %s161
    %p167 = scmp.eq.s32.totalorder %s12, 0
    %p168 = por %p166, %p167
    %p169 = scmp.ne.s32.totalorder %s158, %s161
    %p170 = scmp.eq.s32.totalorder %s17, 1
    %p171 = por %p169, %p170
    %p172 = scmp.ne.s32.totalorder %s161, %s162
    %p173 = scmp.eq.s32.totalorder %s17, 0
    %p174 = por %p172, %p173
    %p175 = scmp.ne.s32.totalorder %s161, %s162
    %p176 = scmp.eq.s32.totalorder %s18, 1
    %p177 = por %p175, %p176
    %p179 = scmp.ne.s32.totalorder %s162, %s178
    %p180 = scmp.eq.s32.totalorder %s18, 0
    %p181 = por %p179, %p180
    %p182 = scmp.le.s32.totalorder 1, %s12
    %p183 = scmp.lt.s32.totalorder %s12, 3
    %p184 = pnand %p182, %p183
    %p185 = pneg %p184
    // Predicated region
    $region9: #{bottleneck_forward.1} parent=5 // pred_check
      _
    $region10: #{bottleneck_forward.1} parent=5 // pred_check_branch
      %187 = sbr.rel (%p184) target = $region12
    $region11: #{bottleneck_forward.1} parent=5 // pred_region
      %s188 = ssub.s32 %s12, 1
      // Predicated region
      $region13: #{bottleneck_forward.1} parent=11 // pred_check
        %p189 = pneg %p59
      $region14: #{bottleneck_forward.1} parent=11 // pred_check_branch
        %191 = sbr.rel (%p189) target = $region16
      $region15: #{bottleneck_forward.1} parent=11 // pred_region
        _
      $region16: #{bottleneck_forward.1} parent=11 // pred_fallthru
        _
      // Predicated region
      $region17: #{bottleneck_forward.1} parent=11 // pred_check
        %p192 = pneg %p80
      $region18: #{bottleneck_forward.1} parent=11 // pred_check_branch
        %194 = sbr.rel (%p192) target = $region20
      $region19: #{bottleneck_forward.1} parent=11 // pred_region
        _
      $region20: #{bottleneck_forward.1} parent=11 // pred_fallthru
        _
      // Predicated region
      $region21: #{bottleneck_forward.1} parent=11 // pred_check
        %p195 = pneg %p101
      $region22: #{bottleneck_forward.1} parent=11 // pred_check_branch
        %197 = sbr.rel (%p195) target = $region24
      $region23: #{bottleneck_forward.1} parent=11 // pred_region
        _
      $region24: #{bottleneck_forward.1} parent=11 // pred_fallthru
        _
      // Predicated region
      $region25: #{bottleneck_forward.1} parent=11 // pred_check
        %p198 = pneg %p122
      $region26: #{bottleneck_forward.1} parent=11 // pred_check_branch
        %200 = sbr.rel (%p198) target = $region28
      $region27: #{bottleneck_forward.1} parent=11 // pred_region
        _
      $region28: #{bottleneck_forward.1} parent=11 // pred_fallthru
        _
    $region12: #{bottleneck_forward.1} parent=5 // pred_fallthru
      _
    %p201 = scmp.lt.s32.totalorder %s12, 2
    // Predicated region
    $region29: #{bottleneck_forward.1} parent=5 // pred_check
      %p202 = pneg %p201
    $region30: #{bottleneck_forward.1} parent=5 // pred_check_branch
      %204 = sbr.rel (%p202) target = $region32
    $region31: #{bottleneck_forward.1} parent=5 // pred_region
      // Predicated region
      $region33: #{bottleneck_forward.1} parent=31 // pred_check
        %p205 = pneg %p32
      $region34: #{bottleneck_forward.1} parent=31 // pred_check_branch
        %207 = sbr.rel (%p205) target = $region36
      $region35: #{bottleneck_forward.1} parent=31 // pred_region
        %p208 = scmp.lt.s32.totalorder %s12, 1
        %s209 = scalar_select %p208, %s12, 1
        %s210 = smul.addr %s209, 2
        %s211 = smul.addr %s210, 4
        %s212 = scalar_lea.vmem %s0, %s211
      $region36: #{bottleneck_forward.1} parent=31 // pred_fallthru
        _
      // Predicated region
      $region37: #{bottleneck_forward.1} parent=31 // pred_check
        %p213 = pneg %p142
      $region38: #{bottleneck_forward.1} parent=31 // pred_check_branch
        %215 = sbr.rel (%p213) target = $region40
      $region39: #{bottleneck_forward.1} parent=31 // pred_region
        %p216 = scmp.lt.s32.totalorder %s12, 1
        %s217 = scalar_select %p216, %s12, 1
        %s218 = smul.addr %s217, 2
        %s219 = smul.addr %s218, 8
        %s220 = scalar_lea.vmem %s5, %s219
      $region40: #{bottleneck_forward.1} parent=31 // pred_fallthru
        _
    $region32: #{bottleneck_forward.1} parent=5 // pred_fallthru
      _
    %p221 = scmp.le.s32.totalorder 1, %s12
    %p222 = scmp.lt.s32.totalorder %s12, 3
    %p223 = pnand %p221, %p222
    %p224 = pneg %p223
    // Predicated region
    $region41: #{bottleneck_forward.1} parent=5 // pred_check
      _
    $region42: #{bottleneck_forward.1} parent=5 // pred_check_branch
      %226 = sbr.rel (%p223) target = $region44
    $region43: #{bottleneck_forward.1} parent=5 // pred_region
      %s227 = ssub.s32 %s12, 1
      %p228 = scmp.lt.s32.totalorder %s17, 1
      %s229 = scalar_select %p228, %s17, 1
      %s230 = smul.addr %s229, 2
      %s231 = smul.addr %s230, 4
      %s232 = scalar_lea.vmem %s0, %s231
      %p233 = pneg %p38
      %p234 = pneg %p35
      %p235 = pneg %p59
      %p236 = pneg %p56
      %p237 = pneg %p80
      %p238 = pneg %p77
      %p239 = pneg %p101
      %p240 = pneg %p98
      %p241 = pneg %p122
      %p242 = pneg %p119
      %p243 = scmp.lt.s32.totalorder %s17, 1
      %s244 = scalar_select %p243, %s17, 1
      %s245 = smul.addr %s244, 2
      %s246 = smul.addr %s245, 8
      %s247 = scalar_lea.vmem %s5, %s246
      %p248 = pneg %p148
      %p249 = pneg %p145
      %p250 = pneg %p174
      %p251 = pneg %p171
      %p252 = scmp.lt.s32.totalorder %s17, 1
      %s253 = scalar_select %p252, %s17, 1
      %s254 = smul.addr %s253, 2
      %s255 = smul.addr %s254, 8
      %s256 = scalar_lea.vmem %s6, %s255
      %p257 = scmp.lt.s32.totalorder %s17, 1
      %s258 = scalar_select %p257, %s17, 1
      %s259 = smul.addr %s258, 2
      %s260 = smul.addr %s259, 4
      %s261 = scalar_lea.vmem %s0, %s260
      %p262 = scmp.lt.s32.totalorder %s17, 1
      %s263 = scalar_select %p262, %s17, 1
      %s264 = smul.addr %s263, 2
      %s265 = smul.addr %s264, 8
      %s266 = scalar_lea.vmem %s5, %s265
      %p267 = scmp.lt.s32.totalorder %s17, 1
      %s268 = scalar_select %p267, %s17, 1
      %s269 = smul.addr %s268, 2
      %s270 = smul.addr %s269, 8
      %s271 = scalar_lea.vmem %s6, %s270
      %v273 = vlaneseq
      %v274 = vand.u32 %v273, 127
      %v275 = vadd.s32 %v274, 128
      %vm276 = vcmp.lt.s32.totalorder %v274, 0
      %v277 = vsub.s32 0, %v274
      %v278 = vsel %vm276, %v277, %v274
      %v279 = vshrl.u32 %v278, 4
      %v280 = vand.u32 %v278, 15
      %v281 = vsub.s32 0, %v280
      %v282 = vsel %vm276, %v281, %v280
      %vm283 = vcmp.lt.s32.totalorder %v275, 0
      %v284 = vsub.s32 0, %v275
      %v285 = vsel %vm283, %v284, %v275
      %v286 = vshrl.u32 %v285, 4
      %v287 = vand.u32 %v285, 15
      %v288 = vsub.s32 0, %v287
      %v289 = vsel %vm283, %v288, %v287
      %vm290 = vcmp.ne.s32.totalorder %v282, 0
      %vm291 = vcmp.ne.s32.totalorder %v289, 0
      %vm292 = vcmp.lt.s32.totalorder %v282, 0
      %vm293 = vcmp.lt.s32.totalorder %v289, 0
      %vm294 = vmand %vm292, %vm290
      %vm295 = vmand %vm293, %vm291
      %v296 = vadd.s32 %v282, 16
      %v297 = vadd.s32 %v289, 16
      %v298 = vsel %vm294, %v296, %v282
      %v299 = vsel %vm295, %v297, %v289
      %vm300 = vcmp.gt.s32.totalorder %v298, 0
      %vm301 = vcmp.gt.s32.totalorder %v299, 0
      %v302 = vsel %vm300, 1, 0
      %v303 = vsel %vm301, 1, 0
      %v304 = vcvt.s32.f32 %v302
      %v305 = vcvt.s32.f32 %v303
      %v306 = vpack.c.bf16 %v304, %v304
      %v307 = vpack.c.bf16 %v305, %v305
      %vm308 = vcmp.lt.s32.totalorder %v298, 15
      %vm309 = vcmp.lt.s32.totalorder %v299, 15
      %v310 = vsel %vm308, 1, 0
      %v311 = vsel %vm309, 1, 0
      %v312 = vcvt.s32.f32 %v310
      %v313 = vcvt.s32.f32 %v311
      %v314 = vpack.c.bf16 %v312, %v312
      %v315 = vpack.c.bf16 %v313, %v313
      %v316 = vld [vmem:[%s261] sm:$0xff]
      %v317 = vld [vmem:[%s1] sm:$0xf]
      %v318 = vld [vmem:[%s1 + $0x4] sm:$0xf]
      %v320 = vunpack.c.l.b16 %v316
      %v321 = vunpack.c.h.b16 %v316
      %v322 = vpack.c.b16 %v320, %v320
      %v323 = vpack.c.b16 %v321, %v321
      %324 = vrot.lane.b32.xlu0 %v322, 17
      %v325 = vpop.permute.xlu0 %324
      %326 = vrot.lane.b32.xlu0 %v323, 17
      %v327 = vpop.permute.xlu0 %326
      %vm328 = vcmask 138240
      %v329 = vsel %vm328, %v325, %v327
      %vm331 = vcmask 138240
      %v334 = vsel %vm331, 0, %v325
      %v337 = vsel %vm331, %v327, 0
      %v339 = vmul.bf16 %v334, %v306
      %v340 = vmul.bf16 %v329, %v307
      %343 = vrot.lane.b32.xlu0 %v314, 2
      %v344 = vpop.permute.xlu0 %343
      %345 = vrot.lane.b32.xlu0 %v315, 2
      %v346 = vpop.permute.xlu0 %345
      %vm347 = vcmask 15360
      %v348 = vsel %vm347, %v344, %v346
      %v352 = vmul.bf16 %v334, %v344
      %v353 = vmul.bf16 %v329, %v348
      %v354 = vmul.bf16 %v337, %v346
      %357 = vrot.lane.b32.xlu0 %v306, 16
      %v358 = vpop.permute.xlu0 %357
      %359 = vrot.lane.b32.xlu0 %v307, 16
      %v360 = vpop.permute.xlu0 %359
      %vm361 = vcmask 130048
      %v362 = vsel %vm361, %v358, %v360
      %v366 = vmul.bf16 %v334, %v358
      %v367 = vmul.bf16 %v329, %v362
      %v368 = vmul.bf16 %v337, %v360
      %369 = vrot.lane.b32.xlu0 %v314, 18
      %v370 = vpop.permute.xlu0 %369
      %371 = vrot.lane.b32.xlu0 %v315, 18
      %v372 = vpop.permute.xlu0 %371
      %vm373 = vcmask 146432
      %v374 = vsel %vm373, %v370, %v372
      %v378 = vmul.bf16 %v334, %v370
      %v379 = vmul.bf16 %v329, %v374
      %v380 = vmul.bf16 %v337, %v372
      %381 = vrot.lane.b32.xlu0 %v306, 32
      %v382 = vpop.permute.xlu0 %381
      %383 = vrot.lane.b32.xlu0 %v307, 32
      %v384 = vpop.permute.xlu0 %383
      %vm385 = vcmask 261120
      %v386 = vsel %vm385, %v382, %v384
      %v390 = vmul.bf16 %v334, %v382
      %v391 = vmul.bf16 %v329, %v386
      %v392 = vmul.bf16 %v337, %v384
      %393 = vrot.lane.b32.xlu0 %v314, 34
      %v394 = vpop.permute.xlu0 %393
      %395 = vrot.lane.b32.xlu0 %v315, 34
      %v396 = vpop.permute.xlu0 %395
      %vm397 = vcmask 277504
      %v398 = vsel %vm397, %v394, %v396
      %v402 = vmul.bf16 %v334, %v394
      %v403 = vmul.bf16 %v329, %v398
      %v404 = vmul.bf16 %v337, %v396
      %v407 = vrot.slane %v334, 4
      %v408 = vrot.slane %v329, 4
      %v409 = vrot.slane %v337, 4
      %410 = vrot.lane.b32.xlu0 %v407, 127
      %v411 = vpop.permute.xlu0 %410
      %412 = vrot.lane.b32.xlu0 %v408, 127
      %v413 = vpop.permute.xlu0 %412
      %414 = vrot.lane.b32.xlu0 %v409, 127
      %v415 = vpop.permute.xlu0 %414
      %vm416 = vcmask 1039360
      %v417 = vsel %vm416, %v411, %v413
      %v418 = vsel %vm416, %v413, %v415
      %422 = vrot.lane.b32.xlu0 %v352, 126
      %v423 = vpop.permute.xlu0 %422
      %424 = vrot.lane.b32.xlu0 %v353, 126
      %v425 = vpop.permute.xlu0 %424
      %426 = vrot.lane.b32.xlu0 %v354, 126
      %v427 = vpop.permute.xlu0 %426
      %vm428 = vcmask 1031168
      %v429 = vsel %vm428, %v423, %v425
      %v430 = vsel %vm428, %v425, %v427
      %v434 = vrot.slane %v366, 4
      %v435 = vrot.slane %v367, 4
      %v436 = vrot.slane %v368, 4
      %437 = vrot.lane.b32.xlu0 %v434, 112
      %v438 = vpop.permute.xlu0 %437
      %439 = vrot.lane.b32.xlu0 %v435, 112
      %v440 = vpop.permute.xlu0 %439
      %441 = vrot.lane.b32.xlu0 %v436, 112
      %v442 = vpop.permute.xlu0 %441
      %vm443 = vcmask 916480
      %v444 = vsel %vm443, %v438, %v440
      %v445 = vsel %vm443, %v440, %v442
      %446 = vrot.lane.b32.xlu0 %v334, 111
      %v447 = vpop.permute.xlu0 %446
      %448 = vrot.lane.b32.xlu0 %v329, 111
      %v449 = vpop.permute.xlu0 %448
      %450 = vrot.lane.b32.xlu0 %v337, 111
      %v451 = vpop.permute.xlu0 %450
      %vm452 = vcmask 908288
      %v453 = vsel %vm452, %v447, %v449
      %v454 = vsel %vm452, %v449, %v451
      %v458 = vrot.slane %v378, 4
      %v459 = vrot.slane %v379, 4
      %v460 = vrot.slane %v380, 4
      %461 = vrot.lane.b32.xlu0 %v458, 110
      %v462 = vpop.permute.xlu0 %461
      %463 = vrot.lane.b32.xlu0 %v459, 110
      %v464 = vpop.permute.xlu0 %463
      %465 = vrot.lane.b32.xlu0 %v460, 110
      %v466 = vpop.permute.xlu0 %465
      %vm467 = vcmask 900096
      %v468 = vsel %vm467, %v462, %v464
      %v469 = vsel %vm467, %v464, %v466
      %473 = vrot.lane.b32.xlu0 %v390, 96
      %v474 = vpop.permute.xlu0 %473
      %475 = vrot.lane.b32.xlu0 %v391, 96
      %v476 = vpop.permute.xlu0 %475
      %477 = vrot.lane.b32.xlu0 %v392, 96
      %v478 = vpop.permute.xlu0 %477
      %vm479 = vcmask 785408
      %v480 = vsel %vm479, %v474, %v476
      %v481 = vsel %vm479, %v476, %v478
      %482 = vrot.lane.b32.xlu0 %v407, 95
      %v483 = vpop.permute.xlu0 %482
      %484 = vrot.lane.b32.xlu0 %v408, 95
      %v485 = vpop.permute.xlu0 %484
      %486 = vrot.lane.b32.xlu0 %v409, 95
      %v487 = vpop.permute.xlu0 %486
      %vm488 = vcmask 777216
      %v489 = vsel %vm488, %v483, %v485
      %v490 = vsel %vm488, %v485, %v487
      %494 = vrot.lane.b32.xlu0 %v402, 94
      %v495 = vpop.permute.xlu0 %494
      %496 = vrot.lane.b32.xlu0 %v403, 94
      %v497 = vpop.permute.xlu0 %496
      %498 = vrot.lane.b32.xlu0 %v404, 94
      %v499 = vpop.permute.xlu0 %498
      %vm500 = vcmask 769024
      %v501 = vsel %vm500, %v495, %v497
      %v502 = vsel %vm500, %v497, %v499
      %vm503 = vcmask 1043456
      %v506 = vsel %vm503, %v339, %v417
      %v510 = vsel %vm503, %v340, %v418
      %v514 = vsel %vm503, %v429, %v444
      %v518 = vsel %vm503, %v430, %v445
      %v522 = vsel %vm503, %v453, %v468
      %v526 = vsel %vm503, %v454, %v469
      %v530 = vsel %vm503, %v480, %v489
      %v534 = vsel %vm503, %v481, %v490
      %v536 = vld [vmem:[%s2] sm:$0xff]
      %v537 = vld [vmem:[%s2 + $0x8] sm:$0xff]
      %539 = vset.pattern.permute.xlu0 0
      %540 = vperm.xlu0 %539, %v536
      %v541 = vpop.permute.xlu0 %540
      %544 = vset.pattern.permute.xlu0 0
      %545 = vperm.xlu0 %544, %v537
      %v546 = vpop.permute.xlu0 %545
      %v550 = vunpack.c.l.b16 %v317
      %v551 = vunpack.c.l.b16 %v318
      %v552 = vpack.c.b16 %v551, %v550
      %vm553 = vcmask 588800
      %v555 = vsel %vm553, %v552, 0
      %v558 = vsel %vm503, %v501, 0
      %v561 = vsel %vm503, %v502, 0
      %563 = vmatprep.subr.bf16.mxu0 %v510
      %564 = vmatpush1.bf16.msra.mxu0 %v506
      %565 = vmatprep.subr.bf16.mxu0 %v518
      %566 = vmatpush1.bf16.msra.mxu0 %v514
      %567 = vmatprep.subr.bf16.mxu0 %v526
      %568 = vmatpush1.bf16.msra.mxu0 %v522
      %569 = vmatprep.subr.bf16.mxu0 %v534
      %570 = vmatpush1.bf16.msra.mxu0 %v530
      %571 = vmatprep.subr.bf16.mxu0 %v561
      %572 = vmatpush1.bf16.msra.mxu0 %v558
      %573 = vmatprep.subr.bf16.mxu0 0
      %574 = vmatpush1.bf16.msra.mxu0 0
      %575 = vmatprep.subr.bf16.mxu0 0
      %576 = vmatpush1.bf16.msra.mxu0 0
      %577 = vmatprep.subr.bf16.mxu0 0
      %578 = vmatpush1.bf16.msra.mxu0 0
      %579 = vmatprep.subr.bf16.mxu0 0
      %580 = vmatpush1.bf16.msra.mxu0 0
      %581 = vmatprep.subr.bf16.mxu0 0
      %582 = vmatpush1.bf16.msra.mxu0 0
      %583 = vmatprep.subr.bf16.mxu0 0
      %584 = vmatpush1.bf16.msra.mxu0 0
      %585 = vmatprep.subr.bf16.mxu0 0
      %586 = vmatpush1.bf16.msra.mxu0 0
      %587 = vmatprep.subr.bf16.mxu0 0
      %588 = vmatpush1.bf16.msra.mxu0 0
      %589 = vmatprep.subr.bf16.mxu0 0
      %590 = vmatpush1.bf16.msra.mxu0 0
      %591 = vmatprep.subr.bf16.mxu0 0
      %592 = vmatpush1.bf16.msra.mxu0 0
      %593 = vmatprep.subr.bf16.mxu0 0
      %594 = vmatpush1.bf16.msra.mxu0 0
      %595 = vmatprep.mubr.bf16.mxu0 0
      %596 = vmatmul.mubr.bf16.gmra.mrb[0].mxu0 %v555
      %v597 = vpop.f32.mrb[0].mxu0
      %v598 = vadd.f32 %v541, %v597
      %v599 = vpop.f32.mrb[0].mxu0
      %v600 = vadd.f32 %v541, %v599
      %v601 = vpop.f32.mrb[0].mxu0
      %v602 = vadd.f32 %v546, %v601
      %v603 = vpop.f32.mrb[0].mxu0
      %v604 = vadd.f32 %v546, %v603
      %605 = vdwg.mxu0
      %v606 = vxor.u32 %v598, 2147483648
      %v607 = vxor.u32 %v600, 2147483648
      %v608 = vxor.u32 %v602, 2147483648
      %v609 = vxor.u32 %v604, 2147483648
      %v610 = vmul.f32 %v606, 1.442695
      %v611 = vpow.pop %v610
      %v612 = vmul.f32 %v607, 1.442695
      %v613 = vpow.pop %v612
      %v614 = vmul.f32 %v608, 1.442695
      %v615 = vpow.pop %v614
      %v616 = vmul.f32 %v609, 1.442695
      %v617 = vpow.pop %v616
      %v618 = vadd.f32 %v611, 1.0
      %v619 = vadd.f32 %v613, 1.0
      %v620 = vadd.f32 %v615, 1.0
      %v621 = vadd.f32 %v617, 1.0
      %v622 = vrcp.pop %v618
      %v623 = vmul.f32 1.0, %v622
      %v624 = vrcp.pop %v619
      %v625 = vmul.f32 1.0, %v624
      %v626 = vrcp.pop %v620
      %v627 = vmul.f32 1.0, %v626
      %v628 = vrcp.pop %v621
      %v629 = vmul.f32 1.0, %v628
      %v630 = vmul.f32 %v598, %v623
      %v631 = vmul.f32 %v600, %v625
      %v632 = vmul.f32 %v602, %v627
      %v633 = vmul.f32 %v604, %v629
      %v634 = vld [vmem:[%s266] sm:$0xff]
      %v635 = vld [vmem:[%s266 + $0x8] sm:$0xff]
      %637 = vset.pattern.permute.xlu0 0
      %638 = vperm.xlu0 %637, %v634
      %v639 = vpop.permute.xlu0 %638
      %642 = vset.pattern.permute.xlu0 0
      %643 = vperm.xlu0 %642, %v635
      %v644 = vpop.permute.xlu0 %643
      %v646 = vadd.f32 %v630, %v639
      %v647 = vadd.f32 %v631, %v639
      %v648 = vadd.f32 %v632, %v644
      %v649 = vadd.f32 %v633, %v644
      %v650 = vld [vmem:[%s3] sm:$0xff]
      %v651 = vpack.c.bf16 %v648, %v646
      %v652 = vpack.c.bf16 %v649, %v647
      %655 = vrot.lane.b32.xlu0 %v651, 17
      %v656 = vpop.permute.xlu0 %655
      %657 = vrot.lane.b32.xlu0 %v652, 17
      %v658 = vpop.permute.xlu0 %657
      %v659 = vsel %vm328, %v656, %v658
      %v662 = vsel %vm331, 0, %v656
      %v665 = vsel %vm331, %v658, 0
      %v667 = vmul.bf16 %v662, %v306
      %v668 = vmul.bf16 %v659, %v307
      %v669 = vmul.bf16 %v662, %v344
      %v670 = vmul.bf16 %v659, %v348
      %v671 = vmul.bf16 %v665, %v346
      %v672 = vmul.bf16 %v662, %v358
      %v673 = vmul.bf16 %v659, %v362
      %v674 = vmul.bf16 %v665, %v360
      %v675 = vmul.bf16 %v662, %v370
      %v676 = vmul.bf16 %v659, %v374
      %v677 = vmul.bf16 %v665, %v372
      %v678 = vmul.bf16 %v662, %v382
      %v679 = vmul.bf16 %v659, %v386
      %v680 = vmul.bf16 %v665, %v384
      %v681 = vmul.bf16 %v662, %v394
      %v682 = vmul.bf16 %v659, %v398
      %v683 = vmul.bf16 %v665, %v396
      %686 = vrot.lane.b32.xlu0 %v662, 127
      %v687 = vpop.permute.xlu0 %686
      %688 = vrot.lane.b32.xlu0 %v659, 127
      %v689 = vpop.permute.xlu0 %688
      %690 = vrot.lane.b32.xlu0 %v665, 127
      %v691 = vpop.permute.xlu0 %690
      %v692 = vsel %vm416, %v687, %v689
      %v693 = vsel %vm416, %v689, %v691
      %699 = vrot.lane.b32.xlu0 %v669, 126
      %v700 = vpop.permute.xlu0 %699
      %701 = vrot.lane.b32.xlu0 %v670, 126
      %v702 = vpop.permute.xlu0 %701
      %703 = vrot.lane.b32.xlu0 %v671, 126
      %v704 = vpop.permute.xlu0 %703
      %v705 = vsel %vm428, %v700, %v702
      %v706 = vsel %vm428, %v702, %v704
      %712 = vrot.lane.b32.xlu0 %v672, 112
      %v713 = vpop.permute.xlu0 %712
      %714 = vrot.lane.b32.xlu0 %v673, 112
      %v715 = vpop.permute.xlu0 %714
      %716 = vrot.lane.b32.xlu0 %v674, 112
      %v717 = vpop.permute.xlu0 %716
      %v718 = vsel %vm443, %v713, %v715
      %v719 = vsel %vm443, %v715, %v717
      %722 = vrot.lane.b32.xlu0 %v662, 111
      %v723 = vpop.permute.xlu0 %722
      %724 = vrot.lane.b32.xlu0 %v659, 111
      %v725 = vpop.permute.xlu0 %724
      %726 = vrot.lane.b32.xlu0 %v665, 111
      %v727 = vpop.permute.xlu0 %726
      %v728 = vsel %vm452, %v723, %v725
      %v729 = vsel %vm452, %v725, %v727
      %735 = vrot.lane.b32.xlu0 %v675, 110
      %v736 = vpop.permute.xlu0 %735
      %737 = vrot.lane.b32.xlu0 %v676, 110
      %v738 = vpop.permute.xlu0 %737
      %739 = vrot.lane.b32.xlu0 %v677, 110
      %v740 = vpop.permute.xlu0 %739
      %v741 = vsel %vm467, %v736, %v738
      %v742 = vsel %vm467, %v738, %v740
      %748 = vrot.lane.b32.xlu0 %v678, 96
      %v749 = vpop.permute.xlu0 %748
      %750 = vrot.lane.b32.xlu0 %v679, 96
      %v751 = vpop.permute.xlu0 %750
      %752 = vrot.lane.b32.xlu0 %v680, 96
      %v753 = vpop.permute.xlu0 %752
      %v754 = vsel %vm479, %v749, %v751
      %v755 = vsel %vm479, %v751, %v753
      %758 = vrot.lane.b32.xlu0 %v662, 95
      %v759 = vpop.permute.xlu0 %758
      %760 = vrot.lane.b32.xlu0 %v659, 95
      %v761 = vpop.permute.xlu0 %760
      %762 = vrot.lane.b32.xlu0 %v665, 95
      %v763 = vpop.permute.xlu0 %762
      %v764 = vsel %vm488, %v759, %v761
      %v765 = vsel %vm488, %v761, %v763
      %771 = vrot.lane.b32.xlu0 %v681, 94
      %v772 = vpop.permute.xlu0 %771
      %773 = vrot.lane.b32.xlu0 %v682, 94
      %v774 = vpop.permute.xlu0 %773
      %775 = vrot.lane.b32.xlu0 %v683, 94
      %v776 = vpop.permute.xlu0 %775
      %v777 = vsel %vm500, %v772, %v774
      %v778 = vsel %vm500, %v774, %v776
      %v781 = vld [vmem:[%s4] sm:$0xff]
      %783 = vset.pattern.permute.xlu0 0
      %784 = vperm.xlu0 %783, %v781
      %v785 = vpop.permute.xlu0 %784
      %v788 = vunpack.c.l.b16 %v650
      %v789 = vunpack.c.h.b16 %v650
      %v790 = vpack.c.b16 %v788, %v788
      %v791 = vpack.c.b16 %v789, %v789
      %vm793 = vcmask 130048
      %v795 = vsel %vm793, %v791, 0
      %797 = vmatprep.subr.bf16.mxu0 %v668
      %798 = vmatpush1.bf16.msra.mxu0 %v667
      %799 = vmatprep.subr.bf16.mxu0 %v693
      %800 = vmatpush1.bf16.msra.mxu0 %v692
      %801 = vmatprep.subr.bf16.mxu0 %v706
      %802 = vmatpush1.bf16.msra.mxu0 %v705
      %803 = vmatprep.subr.bf16.mxu0 %v719
      %804 = vmatpush1.bf16.msra.mxu0 %v718
      %805 = vmatprep.subr.bf16.mxu0 %v729
      %806 = vmatpush1.bf16.msra.mxu0 %v728
      %807 = vmatprep.subr.bf16.mxu0 %v742
      %808 = vmatpush1.bf16.msra.mxu0 %v741
      %809 = vmatprep.subr.bf16.mxu0 %v755
      %810 = vmatpush1.bf16.msra.mxu0 %v754
      %811 = vmatprep.subr.bf16.mxu0 %v765
      %812 = vmatpush1.bf16.msra.mxu0 %v764
      %813 = vmatprep.subr.bf16.mxu0 %v778
      %814 = vmatpush1.bf16.msra.mxu0 %v777
      %815 = vmatprep.subr.bf16.mxu0 0
      %816 = vmatpush1.bf16.msra.mxu0 0
      %817 = vmatprep.subr.bf16.mxu0 0
      %818 = vmatpush1.bf16.msra.mxu0 0
      %819 = vmatprep.subr.bf16.mxu0 0
      %820 = vmatpush1.bf16.msra.mxu0 0
      %821 = vmatprep.subr.bf16.mxu0 0
      %822 = vmatpush1.bf16.msra.mxu0 0
      %823 = vmatprep.subr.bf16.mxu0 0
      %824 = vmatpush1.bf16.msra.mxu0 0
      %825 = vmatprep.subr.bf16.mxu0 0
      %826 = vmatpush1.bf16.msra.mxu0 0
      %827 = vmatprep.subr.bf16.mxu0 0
      %828 = vmatpush1.bf16.msra.mxu0 0
      %829 = vmatprep.mubr.bf16.mxu0 %v795
      %830 = vmatmul.mubr.bf16.gmra.mrb[0].mxu0 %v790
      %v831 = vpop.f32.mrb[0].mxu0
      %v832 = vadd.f32 %v785, %v831
      %v833 = vpop.f32.mrb[0].mxu0
      %v834 = vadd.f32 %v785, %v833
      %v835 = vpop.f32.mrb[0].mxu0
      %v836 = vpop.f32.mrb[0].mxu0
      %837 = vdwg.mxu0
      %v838 = vxor.u32 %v832, 2147483648
      %v839 = vxor.u32 %v834, 2147483648
      %v840 = vmul.f32 %v838, 1.442695
      %v841 = vpow.pop %v840
      %v842 = vmul.f32 %v839, 1.442695
      %v843 = vpow.pop %v842
      %v844 = vadd.f32 %v841, 1.0
      %v845 = vadd.f32 %v843, 1.0
      %v846 = vrcp.pop %v844
      %v847 = vmul.f32 1.0, %v846
      %v848 = vrcp.pop %v845
      %v849 = vmul.f32 1.0, %v848
      %v850 = vmul.f32 %v832, %v847
      %v851 = vmul.f32 %v834, %v849
      %852 = vst [vmem:[%s271] sm:$0xff] %v850
      %853 = vst [vmem:[%s271 + $0x8] sm:$0xff] %v851
      %p854 = scmp.lt.s32.totalorder %s17, 1
      %s855 = scalar_select %p854, %s17, 1
      %s856 = smul.addr %s855, 2
      %s857 = smul.addr %s856, 8
      %s858 = scalar_lea.vmem %s6, %s857
      // Predicated region
      $region45: #{bottleneck_forward.1} parent=43 // pred_check
        %p859 = pneg %p171
      $region46: #{bottleneck_forward.1} parent=43 // pred_check_branch
        %861 = sbr.rel (%p859) target = $region48
      $region47: #{bottleneck_forward.1} parent=43 // pred_region
        _
      $region48: #{bottleneck_forward.1} parent=43 // pred_fallthru
        _
    $region44: #{bottleneck_forward.1} parent=5 // pred_fallthru
      _
    %p862 = scmp.le.s32.totalorder 2, %s12
    // Predicated region
    $region49: #{bottleneck_forward.1} parent=5 // pred_check
      %p863 = pneg %p862
    $region50: #{bottleneck_forward.1} parent=5 // pred_check_branch
      %865 = sbr.rel (%p863) target = $region52
    $region51: #{bottleneck_forward.1} parent=5 // pred_region
      %s866 = ssub.s32 %s12, 2
      // Predicated region
      $region53: #{bottleneck_forward.1} parent=51 // pred_check
        %p867 = pneg %p177
      $region54: #{bottleneck_forward.1} parent=51 // pred_check_branch
        %869 = sbr.rel (%p867) target = $region56
      $region55: #{bottleneck_forward.1} parent=51 // pred_region
        %p870 = scmp.lt.s32.totalorder %s18, 1
        %s871 = scalar_select %p870, %s18, 1
        %s872 = smul.addr %s871, 2
        %s873 = smul.addr %s872, 8
        %s874 = scalar_lea.vmem %s6, %s873
      $region56: #{bottleneck_forward.1} parent=51 // pred_fallthru
        _
    $region52: #{bottleneck_forward.1} parent=5 // pred_fallthru
      _
  $region6: #{bottleneck_forward.1} parent=0 // loop_footer
    %s16 = sadd.s32 1, %s12
  $region7: #{bottleneck_forward.1} parent=0 // loop_footer_branch
    %11 = sbr.rel target = $region3
  $region8: #{bottleneck_forward.1} parent=0 // loop_exit
    _

</llo_original>
